<compile_context>
chip_gen: v6e
topology: v6e:2x2x1
jax: 0.10.0
libtpu: 0.0.40
codegen_flags: <defaults>
</compile_context>

<pallas_src>
import functools

import jax
import jax.numpy as jnp
from jax import lax
from jax.experimental import pallas as pl
from jax.experimental.pallas import tpu as pltpu


def _round_up(x, m):
    return (x + m - 1) // m * m


def _gap_kernel_single_chunk(x_ref, o_ref, *, inv_area):
    # One spatial chunk covers the full row: reduce and write directly (no scratch).
    # The block's last dim equals the full spatial extent, so Mosaic masks the lane
    # padding itself; no manual masking needed.
    x = x_ref[...].astype(jnp.float32)
    o_ref[...] = (jnp.sum(x, axis=-1, keepdims=True) * inv_area).astype(o_ref.dtype)


def _gap_kernel_chunked(x_ref, o_ref, acc_ref, *, inv_area, rem, num_chunks):
    # x_ref:   (row_tile, chunk)  one spatial chunk of a row tile
    # o_ref:   (row_tile, 1)      per-row means (written on the last chunk)
    # acc_ref: (row_tile, 1) f32  running partial sums across spatial chunks
    k = pl.program_id(1)
    last = num_chunks - 1

    @pl.when(k == 0)
    def _init():
        acc_ref[...] = jnp.zeros_like(acc_ref)

    if rem == 0:
        # Every chunk is full: plain convert + accumulate, no masking anywhere.
        acc_ref[...] += jnp.sum(x_ref[...].astype(jnp.float32), axis=-1, keepdims=True)
    else:
        # Masking exists only on the final (partial) chunk; steady state stays unmasked.
        @pl.when(k < last)
        def _full_chunk():
            acc_ref[...] += jnp.sum(
                x_ref[...].astype(jnp.float32), axis=-1, keepdims=True)

        @pl.when(k == last)
        def _partial_chunk():
            x = x_ref[...].astype(jnp.float32)
            lane = lax.broadcasted_iota(jnp.int32, x.shape, 1)
            x = jnp.where(lane < rem, x, 0.0)
            acc_ref[...] += jnp.sum(x, axis=-1, keepdims=True)

    @pl.when(k == last)
    def _finalize():
        o_ref[...] = (acc_ref[...] * inv_area).astype(o_ref.dtype)


def _choose_tiling(rows, spatial, itemsize, target_block_bytes, vmem_cap):
    """Pick (row_tile, chunk) so the input block ~= target_block_bytes while the total
    double-buffered VMEM footprint (incl. 128-lane padding of the (row_tile, 1)
    output/accumulator buffers) stays under vmem_cap."""
    spatial_padded = _round_up(spatial, 128)
    rows8 = _round_up(rows, 8)

    # Single-chunk regime: even an 8-row block holding the full (padded) spatial extent
    # fits the target, so grow row_tile instead of chunking the spatial axis.
    single_chunk = 8 * spatial_padded * itemsize <= target_block_bytes

    if single_chunk:
        # Per-row VMEM cost: double-buffered input + double-buffered (lane-padded) output.
        per_row = 2 * spatial_padded * itemsize + 2 * 128 * itemsize
        row_cap = min(target_block_bytes // (spatial_padded * itemsize),
                      vmem_cap // per_row)
        row_tile = max(8, min(rows8, row_cap // 8 * 8))
    else:
        row_tile = max(8, min(rows8, 256))

    # v7x megacore: keep >= 2 tiles on the "parallel" row axis whenever there is enough
    # work to split, so both TensorCores get a share.
    if rows > 8 and pl.cdiv(rows, row_tile) < 2:
        row_tile = max(8, _round_up(pl.cdiv(rows, 2), 8))

    if single_chunk:
        chunk = spatial
    else:
        per_row_fixed = 2 * 128 * itemsize + 4 * 128  # output dbl-buf + f32 scratch (padded)
        input_budget = min(
            target_block_bytes,
            max(row_tile * 128 * itemsize,
                (vmem_cap - row_tile * per_row_fixed) // 2),
        )
        chunk = max(128, (input_budget // (row_tile * itemsize)) // 128 * 128)
        chunk = min(chunk, spatial)

    return row_tile, chunk


def global_average_pooling(feat, *, target_block_bytes=8 * 1024 * 1024):
    """feat: (N, C, H, W). Returns (N, C) spatial means == F.avg_pool2d(...).view(-1, C)."""
    n, c, h, w = feat.shape
    rows = n * c
    spatial = h * w
    itemsize = jnp.dtype(feat.dtype).itemsize

    # Contiguous collapse; no extra HBM traffic.
    x = feat.reshape(rows, spatial)

    vmem_limit = 32 * 1024 * 1024   # raised scoped VMEM limit (safe on v5e/v6e/v7x)
    vmem_cap = 26 * 1024 * 1024     # sizing budget; leaves headroom under the limit
    row_tile, chunk = _choose_tiling(rows, spatial, itemsize, target_block_bytes, vmem_cap)

    num_row_tiles = pl.cdiv(rows, row_tile)
    num_chunks = pl.cdiv(spatial, chunk)
    grid = (num_row_tiles, num_chunks)

    inv_area = 1.0 / float(spatial)

    if num_chunks == 1:
        kernel = functools.partial(_gap_kernel_single_chunk, inv_area=inv_area)
        scratch_shapes = []
    else:
        kernel = functools.partial(
            _gap_kernel_chunked,
            inv_area=inv_area,
            rem=spatial % chunk,
            num_chunks=num_chunks,
        )
        scratch_shapes = [pltpu.VMEM((row_tile, 1), jnp.float32)]

    cost = pl.CostEstimate(
        flops=rows * spatial,
        transcendentals=0,
        bytes_accessed=rows * spatial * itemsize + rows * itemsize,
    )

    out = pl.pallas_call(
        kernel,
        out_shape=jax.ShapeDtypeStruct((rows, 1), feat.dtype),
        grid_spec=pltpu.PrefetchScalarGridSpec(
            num_scalar_prefetch=0,
            grid=grid,
            in_specs=[pl.BlockSpec((row_tile, chunk), lambda i, k: (i, k))],
            out_specs=pl.BlockSpec((row_tile, 1), lambda i, k: (i, 0)),
            scratch_shapes=scratch_shapes,
        ),
        compiler_params=pltpu.CompilerParams(
            dimension_semantics=("parallel", "arbitrary"),
            vmem_limit_bytes=vmem_limit,
        ),
        cost_estimate=cost,
    )(x)

    return out.reshape(n, c)


if __name__ == "__main__":
    key = jax.random.PRNGKey(0)

    # 1) Small conv feature map: batch=2, channels=4, spatial=16x16 (single-chunk path).
    feat = jax.random.normal(key, (2, 4, 16, 16), dtype=jnp.float32)
    out = jax.block_until_ready(global_average_pooling(feat))
    ref = jnp.mean(feat, axis=(2, 3)).reshape(-1, feat.shape[1])
    assert out.shape == (2, 4), out.shape
    assert jnp.allclose(out, ref, atol=1e-5, rtol=1e-5), "mismatch (single-chunk)"

    # 2) Forced chunking: spatial=576 split into 128-lane chunks with a partial last
    #    chunk (exercises accumulation + gated masking) and 2 row tiles (megacore split).
    feat2 = jax.random.normal(jax.random.PRNGKey(0), (2, 8, 24, 24), dtype=jnp.float32)
    out2 = jax.block_until_ready(global_average_pooling(feat2, target_block_bytes=2048))
    ref2 = jnp.mean(feat2, axis=(2, 3)).reshape(-1, feat2.shape[1])
    assert out2.shape == (2, 8), out2.shape
    assert jnp.allclose(out2, ref2, atol=1e-5, rtol=1e-5), "mismatch (chunked)"

    # 3) rows (=18) not a multiple of row_tile: exercises the padded edge row tile.
    feat3 = jax.random.normal(jax.random.PRNGKey(0), (3, 6, 7, 7), dtype=jnp.float32)
    out3 = jax.block_until_ready(global_average_pooling(feat3))
    ref3 = jnp.mean(feat3, axis=(2, 3)).reshape(-1, feat3.shape[1])
    assert out3.shape == (3, 6), out3.shape
    assert jnp.allclose(out3, ref3, atol=1e-5, rtol=1e-5), "mismatch (edge row tile)"

    print("KERNEL_OK")
</pallas_src>

<mosaic_0001>
module attributes {stable_mosaic.version = 11 : i64} {
  func.func @_gap_kernel_single_chunk(%arg0: i32, %arg1: i32, %arg2: memref<8x256xf32, #tpu.memory_space<vmem>>, %arg3: memref<8x1xf32, #tpu.memory_space<vmem>>) attributes {dimension_semantics = [#tpu.dimension_semantics<parallel>, #tpu.dimension_semantics<arbitrary>], iteration_bounds = array<i64: 1, 1>, scalar_prefetch = 0 : i64, scratch_operands = 0 : i64, tpu.core_type = #tpu.core_type<tc>, window_params = [{transform_indices = @transform_0, window_bounds = array<i64: 8, 256>}, {transform_indices = @transform_1, window_bounds = array<i64: 8, 1>}]} {
    %c0 = arith.constant 0 : index
    %c0_0 = arith.constant 0 : index
    %0 = vector.load %arg2[%c0, %c0_0] : memref<8x256xf32, #tpu.memory_space<vmem>>, vector<8x256xf32>
    %cst = arith.constant dense<0.000000e+00> : vector<8xf32>
    %1 = vector.multi_reduction <add>, %0, %cst [1] : vector<8x256xf32> to vector<8xf32>
    %2 = vector.shape_cast %1 : vector<8xf32> to vector<8x1xf32>
    %cst_1 = arith.constant 3.906250e-03 : f32
    %3 = vector.broadcast %cst_1 : f32 to vector<8x1xf32>
    %4 = arith.mulf %2, %3 : vector<8x1xf32>
    %c0_2 = arith.constant 0 : index
    %c0_3 = arith.constant 0 : index
    %5 = vector.load %arg3[%c0_2, %c0_3] : memref<8x1xf32, #tpu.memory_space<vmem>>, vector<8x1xf32>
    tpu.vector_store %arg3[%c0_2, %c0_3], %4 {strides = array<i32>} : memref<8x1xf32, #tpu.memory_space<vmem>>, vector<8x1xf32>,
    return
  }
  func.func @transform_0(%arg0: i32, %arg1: i32) -> (i32, i32) {
    %c0_i32 = arith.constant 0 : i32
    return %arg0, %arg1 : i32, i32
  }
  func.func @transform_1(%arg0: i32, %arg1: i32) -> (i32, i32) {
    %c0_i32 = arith.constant 0 : i32
    %c0_i32_0 = arith.constant 0 : i32
    return %arg0, %c0_i32 : i32, i32
  }
}

</mosaic_0001>

<llo_original>
// kernel: tpu_custom_call.1
$region0: #{tpu_custom_call.1}
  #allocation0 [shape = 'u32[]', space=smem, size = 0x4, offset = 0x4, fixed_abs, tag = 'smem constant byte address 0x4 - core index']
  #allocation1 [shape = 'u32[144,128]{1,0:T(1,128)}', space=vmem, size = 0x12000, scoped, tag = 'internal scratch']
  %s0 = inlined_call_operand.hbm [shape: f32[8,256], index: 0, kind: input, shape index: {}]
  %s1 = inlined_call_operand.vmem [shape: f32[8,1], index: 1, kind: output, shape index: {}]
  %s2 = sld [smem:[#allocation0]]
  $region18: #{tpu_custom_call.1} parent=0
    _
  %s4 = ssub.s32 1, %s2
  %s5 = scalar_select 0, %s4, %s2
  $region1: #{tpu_custom_call.1} parent=0
    #allocation2 [shape = 'u8[8192]{0}', space=vmem, size = 0x2000, scoped, tag = 'input window, operand 0, single buffered']
    #allocation3 [shape = 's32[1]{0}', space=sflag, size = 0x4, scoped, tag = 'scoped memory for tpu_custom_call.1']
    %6 = vsyncpa [#allocation3], 0
    // Predicated region
    $region2: #{tpu_custom_call.1} parent=1 // pred_check
      _
    $region3: #{tpu_custom_call.1} parent=1 // pred_check_branch
      %8 = sbr.rel (0) target = $region5
    $region4: #{tpu_custom_call.1} parent=1 // pred_region
      %s10 = ssub.s32 256, 256
      %11 = vsyncadd [#allocation3], %s10
      %s13 = sshll.u32 [#allocation2], 4
      %s14 = int_to_ptr.vmem [resolvable:$true] %s13
      %16 = dma.hbm_to_vmem [thread:$0]  %s0, 256, %s14, [#allocation3]
    $region5: #{tpu_custom_call.1} parent=1 // pred_fallthru
      _
    // Predicated region
    $region6: #{tpu_custom_call.1} parent=1 // pred_check
      _
    $region7: #{tpu_custom_call.1} parent=1 // pred_check_branch
      %18 = sbr.rel (0) target = $region9
    $region8: #{tpu_custom_call.1} parent=1 // pred_region
      %19 = dma.done [#allocation3], 256
    $region9: #{tpu_custom_call.1} parent=1 // pred_fallthru
      _
    %v20 = vld [vmem:[#allocation2] sm:$0xff]
    %v21 = vld [vmem:[#allocation2 + $0x8] sm:$0xff]
    %v22 = vadd.f32 %v20, %v21
    %23 = vadd.xlane.f32.xlu0 %v22
    %v24 = vpop.xlane.xlu0 %23
    %v25 = vmul.f32 %v24, 0.00390625
    %vm26 = vcmask 7168
    %27 = vst.msk [vmem:[%s1] sm:$0xff] %vm26, %v25
    // Predicated region
    $region10: #{tpu_custom_call.1} parent=1 // pred_check
      _
    $region11: #{tpu_custom_call.1} parent=1 // pred_check_branch
      %29 = sbr.rel (0) target = $region13
    $region12: #{tpu_custom_call.1} parent=1 // pred_region
      _
    $region13: #{tpu_custom_call.1} parent=1 // pred_fallthru
      _
    // Predicated region
    $region14: #{tpu_custom_call.1} parent=1 // pred_check
      _
    $region15: #{tpu_custom_call.1} parent=1 // pred_check_branch
      %31 = sbr.rel (0) target = $region17
    $region16: #{tpu_custom_call.1} parent=1 // pred_region
      _
    $region17: #{tpu_custom_call.1} parent=1 // pred_fallthru
      _
    %32 = vsyncpa [#allocation3], 1

</llo_original>
